<compile_context>
chip_gen: v7x
topology: tpu7x:2x2x1
jax: 0.10.0
libtpu: 0.0.40
codegen_flags: <defaults>
</compile_context>

<pallas_src>
import jax
import jax.numpy as jnp
from jax.experimental import pallas as pl
from jax.experimental.pallas import tpu as pltpu


def _relu6_kernel(x_ref, o_ref):
    x = x_ref[...]
    # Python scalars are weakly typed: bf16 stays bf16, f32 stays f32.
    o_ref[...] = jnp.minimum(jnp.maximum(x, 0.0), 6.0)


# Below this the pallas_call launch + pipeline prologue dominates; XLA's fused
# clip is already HBM-roofline for a standalone elementwise op.
_MIN_PALLAS_BYTES = 1 << 20


def _round_up(v, m):
    return ((v + m - 1) // m) * m


def _tpu_block_params():
    """Return (target_block_bytes, vmem_limit_bytes, tensorcores_per_chip)."""
    kind = ""
    try:
        kind = jax.devices()[0].device_kind.lower()
    except Exception:
        pass
    if ("v5" in kind) or ("v6" in kind):
        # 128 MiB physical VMEM, 1 TensorCore per chip -> big blocks, 1 step OK.
        return 16 * 1024 * 1024, 80 * 1024 * 1024, 1
    # v7x (and conservative default): 64 MiB VMEM per TC, 2 TCs per chip.
    # 8 MiB blocks -> 32 MiB of double-buffered in+out, 48 MiB limit leaves
    # headroom for internal scratch while staying under 64 MiB physical.
    return 8 * 1024 * 1024, 48 * 1024 * 1024, 2


def _choose_columns(n_elems):
    """Widest lane-dense column count (multiple of 128) that divides n_elems."""
    for cand in (1024, 512, 256, 128):
        if n_elems % cand == 0:
            return cand
    return None


def _choose_tile(extent, quantum, target, min_steps):
    """Tile along one axis: multiple of `quantum`, ~`target` elements per tile,
    and at least `min_steps` (a multiple of it) grid steps when worthwhile so
    both v7x TensorCores stream."""
    tile = max(quantum, (target // quantum) * quantum)
    if tile >= extent:
        tile = extent
    steps = -(-extent // tile)
    if min_steps > 1 and extent > min_steps * quantum:
        if steps < min_steps or steps % min_steps != 0:
            steps = max(min_steps, _round_up(steps, min_steps))
            tile = max(quantum, _round_up(-(-extent // steps), quantum))
            if tile >= extent:
                tile = extent
    return tile


def relu6_pallas(x, donate=False):
    """ReLU6 over an arbitrary-shaped array (NCHW or anything else)."""
    orig_shape = x.shape
    dtype = x.dtype
    n = x.size

    if not jnp.issubdtype(dtype, jnp.floating):
        # Integer ReLU6: avoid the float literals' promotion; XLA clip is exact.
        return jnp.clip(x, 0, 6)

    itemsize = jnp.dtype(dtype).itemsize
    if n == 0 or n * itemsize < _MIN_PALLAS_BYTES:
        return jnp.clip(x, 0.0, 6.0)

    target_bytes, vmem_limit, num_cores = _tpu_block_params()
    alias = {0: 0} if donate else {}
    cparams = pltpu.CompilerParams(
        dimension_semantics=("parallel",),
        vmem_limit_bytes=vmem_limit,
    )

    cols = _choose_columns(n)
    if cols is not None:
        # Fast path: free reshape to a lane-dense 2-D slab, unmasked vst.
        x2d = x.reshape(-1, cols)
        rows = x2d.shape[0]
        tile_rows = _choose_tile(
            rows, 8, max(8, target_bytes // (cols * itemsize)), num_cores)
        grid = (pl.cdiv(rows, tile_rows),)
        out = pl.pallas_call(
            _relu6_kernel,
            out_shape=jax.ShapeDtypeStruct((rows, cols), dtype),
            grid_spec=pltpu.PrefetchScalarGridSpec(
                num_scalar_prefetch=0,
                grid=grid,
                in_specs=[pl.BlockSpec((tile_rows, cols), lambda i: (i, 0))],
                out_specs=pl.BlockSpec((tile_rows, cols), lambda i: (i, 0)),
            ),
            compiler_params=cparams,
            input_output_aliases=alias,
        )(x2d)
        return out.reshape(orig_shape)

    # Ragged element count (not a multiple of 128): run directly on the flat
    # 1-D view. No wrapper-side pad/slice round-trips; block length is a
    # multiple of 1024 (8*128) and Pallas masks the ragged last block's stores.
    x1d = x.reshape(-1)
    tile_len = _choose_tile(n, 1024, max(1024, target_bytes // itemsize), num_cores)
    grid = (pl.cdiv(n, tile_len),)
    out = pl.pallas_call(
        _relu6_kernel,
        out_shape=jax.ShapeDtypeStruct((n,), dtype),
        grid_spec=pltpu.PrefetchScalarGridSpec(
            num_scalar_prefetch=0,
            grid=grid,
            in_specs=[pl.BlockSpec((tile_len,), lambda i: (i,))],
            out_specs=pl.BlockSpec((tile_len,), lambda i: (i,)),
        ),
        compiler_params=cparams,
        input_output_aliases=alias,
    )(x1d)
    return out.reshape(orig_shape)


if __name__ == "__main__":
    key = jax.random.PRNGKey(0)

    # Spec-sized NCHW input: batch=2, channels=4, spatial=16x16 (small ->
    # takes the fused-XLA fallback path by design).
    x_small = jax.random.normal(key, (2, 4, 16, 16), dtype=jnp.float32) * 5.0
    y_small = jax.block_until_ready(relu6_pallas(x_small))
    assert y_small.shape == x_small.shape and y_small.dtype == x_small.dtype
    assert jnp.array_equal(y_small, jnp.clip(x_small, 0.0, 6.0))

    # Exercise the lane-dense 2-D Pallas path (128-divisible element count).
    k1, k2 = jax.random.split(key)
    x_big = jax.random.normal(k1, (2, 8, 128, 128), dtype=jnp.float32) * 5.0
    y_big = jax.block_until_ready(relu6_pallas(x_big))
    assert y_big.shape == x_big.shape and y_big.dtype == x_big.dtype
    assert jnp.array_equal(y_big, jnp.clip(x_big, 0.0, 6.0))

    # Exercise the ragged 1-D Pallas path (element count not a multiple of 128).
    x_rag = jax.random.normal(k2, (1, 3, 299, 301), dtype=jnp.float32) * 5.0
    y_rag = jax.block_until_ready(relu6_pallas(x_rag))
    assert y_rag.shape == x_rag.shape and y_rag.dtype == x_rag.dtype
    assert jnp.array_equal(y_rag, jnp.clip(x_rag, 0.0, 6.0))

    print("KERNEL_OK")
</pallas_src>

<mosaic_0001>
module attributes {stable_mosaic.version = 11 : i64} {
  func.func @_relu6_kernel(%arg0: i32, %arg1: memref<128x1024xf32, #tpu.memory_space<vmem>>, %arg2: memref<128x1024xf32, #tpu.memory_space<vmem>>) attributes {dimension_semantics = [#tpu.dimension_semantics<parallel>], iteration_bounds = array<i64: 2>, scalar_prefetch = 0 : i64, scratch_operands = 0 : i64, tpu.core_type = #tpu.core_type<tc>, window_params = [{transform_indices = @transform_0, window_bounds = array<i64: 128, 1024>}, {transform_indices = @transform_1, window_bounds = array<i64: 128, 1024>}]} {
    %c0 = arith.constant 0 : index
    %c0_0 = arith.constant 0 : index
    %0 = vector.load %arg1[%c0, %c0_0] : memref<128x1024xf32, #tpu.memory_space<vmem>>, vector<128x1024xf32>
    %cst = arith.constant 0.000000e+00 : f32
    %1 = vector.broadcast %cst : f32 to vector<128x1024xf32>
    %2 = arith.maximumf %0, %1 : vector<128x1024xf32>
    %cst_1 = arith.constant 6.000000e+00 : f32
    %3 = vector.broadcast %cst_1 : f32 to vector<128x1024xf32>
    %4 = arith.minimumf %2, %3 : vector<128x1024xf32>
    %c0_2 = arith.constant 0 : index
    %c0_3 = arith.constant 0 : index
    %5 = vector.load %arg2[%c0_2, %c0_3] : memref<128x1024xf32, #tpu.memory_space<vmem>>, vector<128x1024xf32>
    tpu.vector_store %arg2[%c0_2, %c0_3], %4 {strides = array<i32>} : memref<128x1024xf32, #tpu.memory_space<vmem>>, vector<128x1024xf32>,
    return
  }
  func.func @transform_0(%arg0: i32) -> (i32, i32) {
    %c0_i32 = arith.constant 0 : i32
    %c0_i32_0 = arith.constant 0 : i32
    return %arg0, %c0_i32 : i32, i32
  }
  func.func @transform_1(%arg0: i32) -> (i32, i32) {
    %c0_i32 = arith.constant 0 : i32
    %c0_i32_0 = arith.constant 0 : i32
    return %arg0, %c0_i32 : i32, i32
  }
}

</mosaic_0001>

<llo_original>
// kernel: tpu_custom_call.1
$region0: #{tpu_custom_call.1}
  #allocation0 [shape = 'u32[]', space=smem, size = 0x4, offset = 0x4, fixed_abs, tag = 'smem constant byte address 0x4 - core index']
  #allocation1 [shape = 'u32[144,128]{1,0:T(1,128)}', space=vmem, size = 0x12000, scoped, tag = 'internal scratch']
  %s0 = inlined_call_operand.hbm [shape: f32[256,1024], index: 0, kind: input, shape index: {}]
  %s1 = inlined_call_operand.hbm [shape: f32[256,1024], index: 1, kind: output, shape index: {}]
  %s2 = sld [smem:[#allocation0]]
  $region41: #{tpu_custom_call.1} parent=0
    _
  %s4 = ssub.s32 1, %s2
  %s5 = scalar_select 0, %s4, %s2
  $region1: #{tpu_custom_call.1} parent=0
    #allocation2 [shape = 'u8[1048576]{0}', space=vmem, size = 0x100000, scoped, tag = 'input window, operand 0']
    #allocation3 [shape = 's32[2]{0}', space=sflag, size = 0x8, scoped, tag = 'scoped memory for tpu_custom_call.1']
    #allocation4 [shape = 's32[2]{0}', space=sflag, size = 0x8, scoped, tag = 'scoped memory for tpu_custom_call.1']
    #allocation5 [shape = 'u8[1048576]{0}', space=vmem, size = 0x100000, scoped, tag = 'output window, operand 0']
    %6 = vsyncpa [#allocation3], 0
    %s7 = scalar_lea.sflag [#allocation3], 1
    %8 = vsyncpa %s7, 0
    %9 = vsyncpa [#allocation4], 0
    %s10 = scalar_lea.sflag [#allocation4], 1
    %11 = vsyncpa %s10, 0
    loop: start=0, step=1, limit=4
    $region2: #{tpu_custom_call.1} parent=1 // loop_pre_header
      _
    $region3: #{tpu_custom_call.1} parent=1 // loop_header
      %s13 = sphi 0, %s17
      %p14 = scmp.ge.s32.totalorder %s13, 4
      %s23 = sphi 0, %s25
      %s26 = sphi 0, %s23
      %s27 = sphi 0, %s26
      %s43 = sphi 0, %s27
      %s49 = sphi 0, %s51
      %s52 = sphi 0, %s49
      %s53 = sphi 0, %s52
      %s69 = sphi 0, %s53
    $region4: #{tpu_custom_call.1} parent=1 // loop_header_branch
      %16 = sbr.rel (%p14) target = $region8
    $region5: #{tpu_custom_call.1} parent=1 // loop_body
      %s18 = ssub.s32 %s13, 1
      %s19 = ssub.s32 %s13, 2
      %s20 = sadd.s32 %s13, 1
      %s21 = ssub.s32 %s13, %s20
      %p22 = scmp.eq.s32.totalorder %s21, 0
      %s24 = sadd.s32 %s23, 1
      %s25 = scalar_select %p22, %s23, %s24
      %p28 = pneg %p22
      %p29 = scmp.eq.s32.totalorder %s13, 1
      %p30 = por %p28, %p29
      %p31 = scmp.ne.s32.totalorder %s23, %s26
      %p32 = scmp.eq.s32.totalorder %s13, 0
      %p33 = por %p31, %p32
      %p34 = scmp.ne.s32.totalorder %s23, %s26
      %p35 = scmp.eq.s32.totalorder %s18, 1
      %p36 = por %p34, %p35
      %p37 = scmp.ne.s32.totalorder %s26, %s27
      %p38 = scmp.eq.s32.totalorder %s18, 0
      %p39 = por %p37, %p38
      %p40 = scmp.ne.s32.totalorder %s26, %s27
      %p41 = scmp.eq.s32.totalorder %s19, 1
      %p42 = por %p40, %p41
      %p44 = scmp.ne.s32.totalorder %s27, %s43
      %p45 = scmp.eq.s32.totalorder %s19, 0
      %p46 = por %p44, %p45
      %s47 = ssub.s32 %s13, %s20
      %p48 = scmp.eq.s32.totalorder %s47, 0
      %s50 = sadd.s32 %s49, 1
      %s51 = scalar_select %p48, %s49, %s50
      %p54 = pneg %p48
      %p55 = scmp.eq.s32.totalorder %s13, 1
      %p56 = por %p54, %p55
      %p57 = scmp.ne.s32.totalorder %s49, %s52
      %p58 = scmp.eq.s32.totalorder %s13, 0
      %p59 = por %p57, %p58
      %p60 = scmp.ne.s32.totalorder %s49, %s52
      %p61 = scmp.eq.s32.totalorder %s18, 1
      %p62 = por %p60, %p61
      %p63 = scmp.ne.s32.totalorder %s52, %s53
      %p64 = scmp.eq.s32.totalorder %s18, 0
      %p65 = por %p63, %p64
      %p66 = scmp.ne.s32.totalorder %s52, %s53
      %p67 = scmp.eq.s32.totalorder %s19, 1
      %p68 = por %p66, %p67
      %p70 = scmp.ne.s32.totalorder %s53, %s69
      %p71 = scmp.eq.s32.totalorder %s19, 0
      %p72 = por %p70, %p71
      %p73 = scmp.le.s32.totalorder 1, %s13
      %p74 = scmp.lt.s32.totalorder %s13, 3
      %p75 = pnand %p73, %p74
      %p76 = pneg %p75
      // Predicated region
      $region9: #{tpu_custom_call.1} parent=5 // pred_check
        _
      $region10: #{tpu_custom_call.1} parent=5 // pred_check_branch
        %78 = sbr.rel (%p75) target = $region12
      $region11: #{tpu_custom_call.1} parent=5 // pred_region
        %s79 = ssub.s32 %s13, 1
      $region12: #{tpu_custom_call.1} parent=5 // pred_fallthru
        _
      %p80 = scmp.lt.s32.totalorder %s13, 2
      // Predicated region
      $region13: #{tpu_custom_call.1} parent=5 // pred_check
        %p81 = pneg %p80
      $region14: #{tpu_custom_call.1} parent=5 // pred_check_branch
        %83 = sbr.rel (%p81) target = $region16
      $region15: #{tpu_custom_call.1} parent=5 // pred_region
        // Predicated region
        $region17: #{tpu_custom_call.1} parent=15 // pred_check
          %p84 = pneg %p33
        $region18: #{tpu_custom_call.1} parent=15 // pred_check_branch
          %86 = sbr.rel (%p84) target = $region20
        $region19: #{tpu_custom_call.1} parent=15 // pred_region
          %s87 = sand.u32 %s23, 1
          %s88 = scalar_lea.sflag [#allocation3], %s87
          %s89 = sand.u32 %s23, 1
          %s90 = smul.addr %s89, 1024
          %s91 = scalar_lea.vmem [#allocation2], %s90
          %s92 = smul.u32 16, %s13
          %s94 = ssub.s32 16384, 16384
          %95 = vsyncadd %s88, %s94
          %s96 = smul.addr %s92, 8
          %s97 = smul.addr %s96, 128
          %s98 = scalar_lea.hbm %s0, %s97
          %s99 = sshll.u32 %s91, 4
          %s100 = int_to_ptr.vmem [resolvable:$true] %s99
          %105 = dma.hbm_to_vmem [thread:$0]  %s98, 16384, %s100, %s88, 1024, 1024, 64
        $region20: #{tpu_custom_call.1} parent=15 // pred_fallthru
          _
      $region16: #{tpu_custom_call.1} parent=5 // pred_fallthru
        _
      %p106 = scmp.le.s32.totalorder 1, %s13
      %p107 = scmp.lt.s32.totalorder %s13, 3
      %p108 = pnand %p106, %p107
      %p109 = pneg %p108
      // Predicated region
      $region21: #{tpu_custom_call.1} parent=5 // pred_check
        _
      $region22: #{tpu_custom_call.1} parent=5 // pred_check_branch
        %111 = sbr.rel (%p108) target = $region24
      $region23: #{tpu_custom_call.1} parent=5 // pred_region
        %s112 = ssub.s32 %s13, 1
        %s113 = sand.u32 %s26, 1
        %s114 = scalar_lea.sflag [#allocation3], %s113
        %s115 = sand.u32 %s26, 1
        %s116 = smul.addr %s115, 1024
        %s117 = scalar_lea.vmem [#allocation2], %s116
        // Predicated region
        $region25: #{tpu_custom_call.1} parent=23 // pred_check
          %p118 = pneg %p39
        $region26: #{tpu_custom_call.1} parent=23 // pred_check_branch
          %120 = sbr.rel (%p118) target = $region28
        $region27: #{tpu_custom_call.1} parent=23 // pred_region
          %121 = dma.done %s114, 16384
        $region28: #{tpu_custom_call.1} parent=23 // pred_fallthru
          _
        %s122 = sand.u32 %s26, 1
        %s123 = scalar_lea.sflag [#allocation3], %s122
        %s124 = sand.u32 %s26, 1
        %s125 = smul.addr %s124, 1024
        %s126 = scalar_lea.vmem [#allocation2], %s125
        %p127 = pneg %p39
        %p128 = pneg %p36
        %p129 = pneg %p65
        %p130 = pneg %p62
        %s131 = sand.u32 %s52, 1
        %s132 = scalar_lea.sflag [#allocation4], %s131
        %s133 = sand.u32 %s52, 1
        %s134 = smul.addr %s133, 1024
        %s135 = scalar_lea.vmem [#allocation5], %s134
        %s136 = smul.u32 16, %s18
        %s137 = smul.u32 16, %s18
        %v138 = vld [vmem:[%s117] sm:$0xff]
        %v139 = vld [vmem:[%s117 + $0x8] sm:$0xff]
        %v140 = vld [vmem:[%s117 + $0x10] sm:$0xff]
        %v141 = vld [vmem:[%s117 + $0x18] sm:$0xff]
        %v142 = vld [vmem:[%s117 + $0x20] sm:$0xff]
        %v143 = vld [vmem:[%s117 + $0x28] sm:$0xff]
        %v144 = vld [vmem:[%s117 + $0x30] sm:$0xff]
        %v145 = vld [vmem:[%s117 + $0x38] sm:$0xff]
        %v146 = vld [vmem:[%s117 + $0x40] sm:$0xff]
        %v147 = vld [vmem:[%s117 + $0x48] sm:$0xff]
        %v148 = vld [vmem:[%s117 + $0x50] sm:$0xff]
        %v149 = vld [vmem:[%s117 + $0x58] sm:$0xff]
        %v150 = vld [vmem:[%s117 + $0x60] sm:$0xff]
        %v151 = vld [vmem:[%s117 + $0x68] sm:$0xff]
        %v152 = vld [vmem:[%s117 + $0x70] sm:$0xff]
        %v153 = vld [vmem:[%s117 + $0x78] sm:$0xff]
        %v154 = vld [vmem:[%s117 + $0x80] sm:$0xff]
        %v155 = vld [vmem:[%s117 + $0x88] sm:$0xff]
        %v156 = vld [vmem:[%s117 + $0x90] sm:$0xff]
        %v157 = vld [vmem:[%s117 + $0x98] sm:$0xff]
        %v158 = vld [vmem:[%s117 + $0xa0] sm:$0xff]
        %v159 = vld [vmem:[%s117 + $0xa8] sm:$0xff]
        %v160 = vld [vmem:[%s117 + $0xb0] sm:$0xff]
        %v161 = vld [vmem:[%s117 + $0xb8] sm:$0xff]
        %v162 = vld [vmem:[%s117 + $0xc0] sm:$0xff]
        %v163 = vld [vmem:[%s117 + $0xc8] sm:$0xff]
        %v164 = vld [vmem:[%s117 + $0xd0] sm:$0xff]
        %v165 = vld [vmem:[%s117 + $0xd8] sm:$0xff]
        %v166 = vld [vmem:[%s117 + $0xe0] sm:$0xff]
        %v167 = vld [vmem:[%s117 + $0xe8] sm:$0xff]
        %v168 = vld [vmem:[%s117 + $0xf0] sm:$0xff]
        %v169 = vld [vmem:[%s117 + $0xf8] sm:$0xff]
        %v170 = vld [vmem:[%s117 + $0x100] sm:$0xff]
        %v171 = vld [vmem:[%s117 + $0x108] sm:$0xff]
        %v172 = vld [vmem:[%s117 + $0x110] sm:$0xff]
        %v173 = vld [vmem:[%s117 + $0x118] sm:$0xff]
        %v174 = vld [vmem:[%s117 + $0x120] sm:$0xff]
        %v175 = vld [vmem:[%s117 + $0x128] sm:$0xff]
        %v176 = vld [vmem:[%s117 + $0x130] sm:$0xff]
        %v177 = vld [vmem:[%s117 + $0x138] sm:$0xff]
        %v178 = vld [vmem:[%s117 + $0x140] sm:$0xff]
        %v179 = vld [vmem:[%s117 + $0x148] sm:$0xff]
        %v180 = vld [vmem:[%s117 + $0x150] sm:$0xff]
        %v181 = vld [vmem:[%s117 + $0x158] sm:$0xff]
        %v182 = vld [vmem:[%s117 + $0x160] sm:$0xff]
        %v183 = vld [vmem:[%s117 + $0x168] sm:$0xff]
        %v184 = vld [vmem:[%s117 + $0x170] sm:$0xff]
        %v185 = vld [vmem:[%s117 + $0x178] sm:$0xff]
        %v186 = vld [vmem:[%s117 + $0x180] sm:$0xff]
        %v187 = vld [vmem:[%s117 + $0x188] sm:$0xff]
        %v188 = vld [vmem:[%s117 + $0x190] sm:$0xff]
        %v189 = vld [vmem:[%s117 + $0x198] sm:$0xff]
        %v190 = vld [vmem:[%s117 + $0x1a0] sm:$0xff]
        %v191 = vld [vmem:[%s117 + $0x1a8] sm:$0xff]
        %v192 = vld [vmem:[%s117 + $0x1b0] sm:$0xff]
        %v193 = vld [vmem:[%s117 + $0x1b8] sm:$0xff]
        %v194 = vld [vmem:[%s117 + $0x1c0] sm:$0xff]
        %v195 = vld [vmem:[%s117 + $0x1c8] sm:$0xff]
        %v196 = vld [vmem:[%s117 + $0x1d0] sm:$0xff]
        %v197 = vld [vmem:[%s117 + $0x1d8] sm:$0xff]
        %v198 = vld [vmem:[%s117 + $0x1e0] sm:$0xff]
        %v199 = vld [vmem:[%s117 + $0x1e8] sm:$0xff]
        %v200 = vld [vmem:[%s117 + $0x1f0] sm:$0xff]
        %v201 = vld [vmem:[%s117 + $0x1f8] sm:$0xff]
        %v202 = vld [vmem:[%s117 + $0x200] sm:$0xff]
        %v203 = vld [vmem:[%s117 + $0x208] sm:$0xff]
        %v204 = vld [vmem:[%s117 + $0x210] sm:$0xff]
        %v205 = vld [vmem:[%s117 + $0x218] sm:$0xff]
        %v206 = vld [vmem:[%s117 + $0x220] sm:$0xff]
        %v207 = vld [vmem:[%s117 + $0x228] sm:$0xff]
        %v208 = vld [vmem:[%s117 + $0x230] sm:$0xff]
        %v209 = vld [vmem:[%s117 + $0x238] sm:$0xff]
        %v210 = vld [vmem:[%s117 + $0x240] sm:$0xff]
        %v211 = vld [vmem:[%s117 + $0x248] sm:$0xff]
        %v212 = vld [vmem:[%s117 + $0x250] sm:$0xff]
        %v213 = vld [vmem:[%s117 + $0x258] sm:$0xff]
        %v214 = vld [vmem:[%s117 + $0x260] sm:$0xff]
        %v215 = vld [vmem:[%s117 + $0x268] sm:$0xff]
        %v216 = vld [vmem:[%s117 + $0x270] sm:$0xff]
        %v217 = vld [vmem:[%s117 + $0x278] sm:$0xff]
        %v218 = vld [vmem:[%s117 + $0x280] sm:$0xff]
        %v219 = vld [vmem:[%s117 + $0x288] sm:$0xff]
        %v220 = vld [vmem:[%s117 + $0x290] sm:$0xff]
        %v221 = vld [vmem:[%s117 + $0x298] sm:$0xff]
        %v222 = vld [vmem:[%s117 + $0x2a0] sm:$0xff]
        %v223 = vld [vmem:[%s117 + $0x2a8] sm:$0xff]
        %v224 = vld [vmem:[%s117 + $0x2b0] sm:$0xff]
        %v225 = vld [vmem:[%s117 + $0x2b8] sm:$0xff]
        %v226 = vld [vmem:[%s117 + $0x2c0] sm:$0xff]
        %v227 = vld [vmem:[%s117 + $0x2c8] sm:$0xff]
        %v228 = vld [vmem:[%s117 + $0x2d0] sm:$0xff]
        %v229 = vld [vmem:[%s117 + $0x2d8] sm:$0xff]
        %v230 = vld [vmem:[%s117 + $0x2e0] sm:$0xff]
        %v231 = vld [vmem:[%s117 + $0x2e8] sm:$0xff]
        %v232 = vld [vmem:[%s117 + $0x2f0] sm:$0xff]
        %v233 = vld [vmem:[%s117 + $0x2f8] sm:$0xff]
        %v234 = vld [vmem:[%s117 + $0x300] sm:$0xff]
        %v235 = vld [vmem:[%s117 + $0x308] sm:$0xff]
        %v236 = vld [vmem:[%s117 + $0x310] sm:$0xff]
        %v237 = vld [vmem:[%s117 + $0x318] sm:$0xff]
        %v238 = vld [vmem:[%s117 + $0x320] sm:$0xff]
        %v239 = vld [vmem:[%s117 + $0x328] sm:$0xff]
        %v240 = vld [vmem:[%s117 + $0x330] sm:$0xff]
        %v241 = vld [vmem:[%s117 + $0x338] sm:$0xff]
        %v242 = vld [vmem:[%s117 + $0x340] sm:$0xff]
        %v243 = vld [vmem:[%s117 + $0x348] sm:$0xff]
        %v244 = vld [vmem:[%s117 + $0x350] sm:$0xff]
        %v245 = vld [vmem:[%s117 + $0x358] sm:$0xff]
        %v246 = vld [vmem:[%s117 + $0x360] sm:$0xff]
        %v247 = vld [vmem:[%s117 + $0x368] sm:$0xff]
        %v248 = vld [vmem:[%s117 + $0x370] sm:$0xff]
        %v249 = vld [vmem:[%s117 + $0x378] sm:$0xff]
        %v250 = vld [vmem:[%s117 + $0x380] sm:$0xff]
        %v251 = vld [vmem:[%s117 + $0x388] sm:$0xff]
        %v252 = vld [vmem:[%s117 + $0x390] sm:$0xff]
        %v253 = vld [vmem:[%s117 + $0x398] sm:$0xff]
        %v254 = vld [vmem:[%s117 + $0x3a0] sm:$0xff]
        %v255 = vld [vmem:[%s117 + $0x3a8] sm:$0xff]
        %v256 = vld [vmem:[%s117 + $0x3b0] sm:$0xff]
        %v257 = vld [vmem:[%s117 + $0x3b8] sm:$0xff]
        %v258 = vld [vmem:[%s117 + $0x3c0] sm:$0xff]
        %v259 = vld [vmem:[%s117 + $0x3c8] sm:$0xff]
        %v260 = vld [vmem:[%s117 + $0x3d0] sm:$0xff]
        %v261 = vld [vmem:[%s117 + $0x3d8] sm:$0xff]
        %v262 = vld [vmem:[%s117 + $0x3e0] sm:$0xff]
        %v263 = vld [vmem:[%s117 + $0x3e8] sm:$0xff]
        %v264 = vld [vmem:[%s117 + $0x3f0] sm:$0xff]
        %v265 = vld [vmem:[%s117 + $0x3f8] sm:$0xff]
        %v266 = vmax.f32 %v138, 0.0
        %v267 = vmax.f32 %v139, 0.0
        %v268 = vmax.f32 %v140, 0.0
        %v269 = vmax.f32 %v141, 0.0
        %v270 = vmax.f32 %v142, 0.0
        %v271 = vmax.f32 %v143, 0.0
        %v272 = vmax.f32 %v144, 0.0
        %v273 = vmax.f32 %v145, 0.0
        %v274 = vmax.f32 %v146, 0.0
        %v275 = vmax.f32 %v147, 0.0
        %v276 = vmax.f32 %v148, 0.0
        %v277 = vmax.f32 %v149, 0.0
        %v278 = vmax.f32 %v150, 0.0
        %v279 = vmax.f32 %v151, 0.0
        %v280 = vmax.f32 %v152, 0.0
        %v281 = vmax.f32 %v153, 0.0
        %v282 = vmax.f32 %v154, 0.0
        %v283 = vmax.f32 %v155, 0.0
        %v284 = vmax.f32 %v156, 0.0
        %v285 = vmax.f32 %v157, 0.0
        %v286 = vmax.f32 %v158, 0.0
        %v287 = vmax.f32 %v159, 0.0
        %v288 = vmax.f32 %v160, 0.0
        %v289 = vmax.f32 %v161, 0.0
        %v290 = vmax.f32 %v162, 0.0
        %v291 = vmax.f32 %v163, 0.0
        %v292 = vmax.f32 %v164, 0.0
        %v293 = vmax.f32 %v165, 0.0
        %v294 = vmax.f32 %v166, 0.0
        %v295 = vmax.f32 %v167, 0.0
        %v296 = vmax.f32 %v168, 0.0
        %v297 = vmax.f32 %v169, 0.0
        %v298 = vmax.f32 %v170, 0.0
        %v299 = vmax.f32 %v171, 0.0
        %v300 = vmax.f32 %v172, 0.0
        %v301 = vmax.f32 %v173, 0.0
        %v302 = vmax.f32 %v174, 0.0
        %v303 = vmax.f32 %v175, 0.0
        %v304 = vmax.f32 %v176, 0.0
        %v305 = vmax.f32 %v177, 0.0
        %v306 = vmax.f32 %v178, 0.0
        %v307 = vmax.f32 %v179, 0.0
        %v308 = vmax.f32 %v180, 0.0
        %v309 = vmax.f32 %v181, 0.0
        %v310 = vmax.f32 %v182, 0.0
        %v311 = vmax.f32 %v183, 0.0
        %v312 = vmax.f32 %v184, 0.0
        %v313 = vmax.f32 %v185, 0.0
        %v314 = vmax.f32 %v186, 0.0
        %v315 = vmax.f32 %v187, 0.0
        %v316 = vmax.f32 %v188, 0.0
        %v317 = vmax.f32 %v189, 0.0
        %v318 = vmax.f32 %v190, 0.0
        %v319 = vmax.f32 %v191, 0.0
        %v320 = vmax.f32 %v192, 0.0
        %v321 = vmax.f32 %v193, 0.0
        %v322 = vmax.f32 %v194, 0.0
        %v323 = vmax.f32 %v195, 0.0
        %v324 = vmax.f32 %v196, 0.0
        %v325 = vmax.f32 %v197, 0.0
        %v326 = vmax.f32 %v198, 0.0
        %v327 = vmax.f32 %v199, 0.0
        %v328 = vmax.f32 %v200, 0.0
        %v329 = vmax.f32 %v201, 0.0
        %v330 = vmax.f32 %v202, 0.0
        %v331 = vmax.f32 %v203, 0.0
        %v332 = vmax.f32 %v204, 0.0
        %v333 = vmax.f32 %v205, 0.0
        %v334 = vmax.f32 %v206, 0.0
        %v335 = vmax.f32 %v207, 0.0
        %v336 = vmax.f32 %v208, 0.0
        %v337 = vmax.f32 %v209, 0.0
        %v338 = vmax.f32 %v210, 0.0
        %v339 = vmax.f32 %v211, 0.0
        %v340 = vmax.f32 %v212, 0.0
        %v341 = vmax.f32 %v213, 0.0
        %v342 = vmax.f32 %v214, 0.0
        %v343 = vmax.f32 %v215, 0.0
        %v344 = vmax.f32 %v216, 0.0
        %v345 = vmax.f32 %v217, 0.0
        %v346 = vmax.f32 %v218, 0.0
        %v347 = vmax.f32 %v219, 0.0
        %v348 = vmax.f32 %v220, 0.0
        %v349 = vmax.f32 %v221, 0.0
        %v350 = vmax.f32 %v222, 0.0
        %v351 = vmax.f32 %v223, 0.0
        %v352 = vmax.f32 %v224, 0.0
        %v353 = vmax.f32 %v225, 0.0
        %v354 = vmax.f32 %v226, 0.0
        %v355 = vmax.f32 %v227, 0.0
        %v356 = vmax.f32 %v228, 0.0
        %v357 = vmax.f32 %v229, 0.0
        %v358 = vmax.f32 %v230, 0.0
        %v359 = vmax.f32 %v231, 0.0
        %v360 = vmax.f32 %v232, 0.0
        %v361 = vmax.f32 %v233, 0.0
        %v362 = vmax.f32 %v234, 0.0
        %v363 = vmax.f32 %v235, 0.0
        %v364 = vmax.f32 %v236, 0.0
        %v365 = vmax.f32 %v237, 0.0
        %v366 = vmax.f32 %v238, 0.0
        %v367 = vmax.f32 %v239, 0.0
        %v368 = vmax.f32 %v240, 0.0
        %v369 = vmax.f32 %v241, 0.0
        %v370 = vmax.f32 %v242, 0.0
        %v371 = vmax.f32 %v243, 0.0
        %v372 = vmax.f32 %v244, 0.0
        %v373 = vmax.f32 %v245, 0.0
        %v374 = vmax.f32 %v246, 0.0
        %v375 = vmax.f32 %v247, 0.0
        %v376 = vmax.f32 %v248, 0.0
        %v377 = vmax.f32 %v249, 0.0
        %v378 = vmax.f32 %v250, 0.0
        %v379 = vmax.f32 %v251, 0.0
        %v380 = vmax.f32 %v252, 0.0
        %v381 = vmax.f32 %v253, 0.0
        %v382 = vmax.f32 %v254, 0.0
        %v383 = vmax.f32 %v255, 0.0
        %v384 = vmax.f32 %v256, 0.0
        %v385 = vmax.f32 %v257, 0.0
        %v386 = vmax.f32 %v258, 0.0
        %v387 = vmax.f32 %v259, 0.0
        %v388 = vmax.f32 %v260, 0.0
        %v389 = vmax.f32 %v261, 0.0
        %v390 = vmax.f32 %v262, 0.0
        %v391 = vmax.f32 %v263, 0.0
        %v392 = vmax.f32 %v264, 0.0
        %v393 = vmax.f32 %v265, 0.0
        %v394 = vmin.f32 %v266, 6.0
        %v395 = vmin.f32 %v267, 6.0
        %v396 = vmin.f32 %v268, 6.0
        %v397 = vmin.f32 %v269, 6.0
        %v398 = vmin.f32 %v270, 6.0
        %v399 = vmin.f32 %v271, 6.0
        %v400 = vmin.f32 %v272, 6.0
        %v401 = vmin.f32 %v273, 6.0
        %v402 = vmin.f32 %v274, 6.0
        %v403 = vmin.f32 %v275, 6.0
        %v404 = vmin.f32 %v276, 6.0
        %v405 = vmin.f32 %v277, 6.0
        %v406 = vmin.f32 %v278, 6.0
        %v407 = vmin.f32 %v279, 6.0
        %v408 = vmin.f32 %v280, 6.0
        %v409 = vmin.f32 %v281, 6.0
        %v410 = vmin.f32 %v282, 6.0
        %v411 = vmin.f32 %v283, 6.0
        %v412 = vmin.f32 %v284, 6.0
        %v413 = vmin.f32 %v285, 6.0
        %v414 = vmin.f32 %v286, 6.0
        %v415 = vmin.f32 %v287, 6.0
        %v416 = vmin.f32 %v288, 6.0
        %v417 = vmin.f32 %v289, 6.0
        %v418 = vmin.f32 %v290, 6.0
        %v419 = vmin.f32 %v291, 6.0
        %v420 = vmin.f32 %v292, 6.0
        %v421 = vmin.f32 %v293, 6.0
        %v422 = vmin.f32 %v294, 6.0
        %v423 = vmin.f32 %v295, 6.0
        %v424 = vmin.f32 %v296, 6.0
        %v425 = vmin.f32 %v297, 6.0
        %v426 = vmin.f32 %v298, 6.0
        %v427 = vmin.f32 %v299, 6.0
        %v428 = vmin.f32 %v300, 6.0
        %v429 = vmin.f32 %v301, 6.0
        %v430 = vmin.f32 %v302, 6.0
        %v431 = vmin.f32 %v303, 6.0
        %v432 = vmin.f32 %v304, 6.0
        %v433 = vmin.f32 %v305, 6.0
        %v434 = vmin.f32 %v306, 6.0
        %v435 = vmin.f32 %v307, 6.0
        %v436 = vmin.f32 %v308, 6.0
        %v437 = vmin.f32 %v309, 6.0
        %v438 = vmin.f32 %v310, 6.0
        %v439 = vmin.f32 %v311, 6.0
        %v440 = vmin.f32 %v312, 6.0
        %v441 = vmin.f32 %v313, 6.0
        %v442 = vmin.f32 %v314, 6.0
        %v443 = vmin.f32 %v315, 6.0
        %v444 = vmin.f32 %v316, 6.0
        %v445 = vmin.f32 %v317, 6.0
        %v446 = vmin.f32 %v318, 6.0
        %v447 = vmin.f32 %v319, 6.0
        %v448 = vmin.f32 %v320, 6.0
        %v449 = vmin.f32 %v321, 6.0
        %v450 = vmin.f32 %v322, 6.0
        %v451 = vmin.f32 %v323, 6.0
        %v452 = vmin.f32 %v324, 6.0
        %v453 = vmin.f32 %v325, 6.0
        %v454 = vmin.f32 %v326, 6.0
        %v455 = vmin.f32 %v327, 6.0
        %v456 = vmin.f32 %v328, 6.0
        %v457 = vmin.f32 %v329, 6.0
        %v458 = vmin.f32 %v330, 6.0
        %v459 = vmin.f32 %v331, 6.0
        %v460 = vmin.f32 %v332, 6.0
        %v461 = vmin.f32 %v333, 6.0
        %v462 = vmin.f32 %v334, 6.0
        %v463 = vmin.f32 %v335, 6.0
        %v464 = vmin.f32 %v336, 6.0
        %v465 = vmin.f32 %v337, 6.0
        %v466 = vmin.f32 %v338, 6.0
        %v467 = vmin.f32 %v339, 6.0
        %v468 = vmin.f32 %v340, 6.0
        %v469 = vmin.f32 %v341, 6.0
        %v470 = vmin.f32 %v342, 6.0
        %v471 = vmin.f32 %v343, 6.0
        %v472 = vmin.f32 %v344, 6.0
        %v473 = vmin.f32 %v345, 6.0
        %v474 = vmin.f32 %v346, 6.0
        %v475 = vmin.f32 %v347, 6.0
        %v476 = vmin.f32 %v348, 6.0
        %v477 = vmin.f32 %v349, 6.0
        %v478 = vmin.f32 %v350, 6.0
        %v479 = vmin.f32 %v351, 6.0
        %v480 = vmin.f32 %v352, 6.0
        %v481 = vmin.f32 %v353, 6.0
        %v482 = vmin.f32 %v354, 6.0
        %v483 = vmin.f32 %v355, 6.0
        %v484 = vmin.f32 %v356, 6.0
        %v485 = vmin.f32 %v357, 6.0
        %v486 = vmin.f32 %v358, 6.0
        %v487 = vmin.f32 %v359, 6.0
        %v488 = vmin.f32 %v360, 6.0
        %v489 = vmin.f32 %v361, 6.0
        %v490 = vmin.f32 %v362, 6.0
        %v491 = vmin.f32 %v363, 6.0
        %v492 = vmin.f32 %v364, 6.0
        %v493 = vmin.f32 %v365, 6.0
        %v494 = vmin.f32 %v366, 6.0
        %v495 = vmin.f32 %v367, 6.0
        %v496 = vmin.f32 %v368, 6.0
        %v497 = vmin.f32 %v369, 6.0
        %v498 = vmin.f32 %v370, 6.0
        %v499 = vmin.f32 %v371, 6.0
        %v500 = vmin.f32 %v372, 6.0
        %v501 = vmin.f32 %v373, 6.0
        %v502 = vmin.f32 %v374, 6.0
        %v503 = vmin.f32 %v375, 6.0
        %v504 = vmin.f32 %v376, 6.0
        %v505 = vmin.f32 %v377, 6.0
        %v506 = vmin.f32 %v378, 6.0
        %v507 = vmin.f32 %v379, 6.0
        %v508 = vmin.f32 %v380, 6.0
        %v509 = vmin.f32 %v381, 6.0
        %v510 = vmin.f32 %v382, 6.0
        %v511 = vmin.f32 %v383, 6.0
        %v512 = vmin.f32 %v384, 6.0
        %v513 = vmin.f32 %v385, 6.0
        %v514 = vmin.f32 %v386, 6.0
        %v515 = vmin.f32 %v387, 6.0
        %v516 = vmin.f32 %v388, 6.0
        %v517 = vmin.f32 %v389, 6.0
        %v518 = vmin.f32 %v390, 6.0
        %v519 = vmin.f32 %v391, 6.0
        %v520 = vmin.f32 %v392, 6.0
        %v521 = vmin.f32 %v393, 6.0
        %522 = vst [vmem:[%s135] sm:$0xff] %v394
        %523 = vst [vmem:[%s135 + $0x8] sm:$0xff] %v395
        %524 = vst [vmem:[%s135 + $0x10] sm:$0xff] %v396
        %525 = vst [vmem:[%s135 + $0x18] sm:$0xff] %v397
        %526 = vst [vmem:[%s135 + $0x20] sm:$0xff] %v398
        %527 = vst [vmem:[%s135 + $0x28] sm:$0xff] %v399
        %528 = vst [vmem:[%s135 + $0x30] sm:$0xff] %v400
        %529 = vst [vmem:[%s135 + $0x38] sm:$0xff] %v401
        %530 = vst [vmem:[%s135 + $0x40] sm:$0xff] %v402
        %531 = vst [vmem:[%s135 + $0x48] sm:$0xff] %v403
        %532 = vst [vmem:[%s135 + $0x50] sm:$0xff] %v404
        %533 = vst [vmem:[%s135 + $0x58] sm:$0xff] %v405
        %534 = vst [vmem:[%s135 + $0x60] sm:$0xff] %v406
        %535 = vst [vmem:[%s135 + $0x68] sm:$0xff] %v407
        %536 = vst [vmem:[%s135 + $0x70] sm:$0xff] %v408
        %537 = vst [vmem:[%s135 + $0x78] sm:$0xff] %v409
        %538 = vst [vmem:[%s135 + $0x80] sm:$0xff] %v410
        %539 = vst [vmem:[%s135 + $0x88] sm:$0xff] %v411
        %540 = vst [vmem:[%s135 + $0x90] sm:$0xff] %v412
        %541 = vst [vmem:[%s135 + $0x98] sm:$0xff] %v413
        %542 = vst [vmem:[%s135 + $0xa0] sm:$0xff] %v414
        %543 = vst [vmem:[%s135 + $0xa8] sm:$0xff] %v415
        %544 = vst [vmem:[%s135 + $0xb0] sm:$0xff] %v416
        %545 = vst [vmem:[%s135 + $0xb8] sm:$0xff] %v417
        %546 = vst [vmem:[%s135 + $0xc0] sm:$0xff] %v418
        %547 = vst [vmem:[%s135 + $0xc8] sm:$0xff] %v419
        %548 = vst [vmem:[%s135 + $0xd0] sm:$0xff] %v420
        %549 = vst [vmem:[%s135 + $0xd8] sm:$0xff] %v421
        %550 = vst [vmem:[%s135 + $0xe0] sm:$0xff] %v422
        %551 = vst [vmem:[%s135 + $0xe8] sm:$0xff] %v423
        %552 = vst [vmem:[%s135 + $0xf0] sm:$0xff] %v424
        %553 = vst [vmem:[%s135 + $0xf8] sm:$0xff] %v425
        %554 = vst [vmem:[%s135 + $0x100] sm:$0xff] %v426
        %555 = vst [vmem:[%s135 + $0x108] sm:$0xff] %v427
        %556 = vst [vmem:[%s135 + $0x110] sm:$0xff] %v428
        %557 = vst [vmem:[%s135 + $0x118] sm:$0xff] %v429
        %558 = vst [vmem:[%s135 + $0x120] sm:$0xff] %v430
        %559 = vst [vmem:[%s135 + $0x128] sm:$0xff] %v431
        %560 = vst [vmem:[%s135 + $0x130] sm:$0xff] %v432
        %561 = vst [vmem:[%s135 + $0x138] sm:$0xff] %v433
        %562 = vst [vmem:[%s135 + $0x140] sm:$0xff] %v434
        %563 = vst [vmem:[%s135 + $0x148] sm:$0xff] %v435
        %564 = vst [vmem:[%s135 + $0x150] sm:$0xff] %v436
        %565 = vst [vmem:[%s135 + $0x158] sm:$0xff] %v437
        %566 = vst [vmem:[%s135 + $0x160] sm:$0xff] %v438
        %567 = vst [vmem:[%s135 + $0x168] sm:$0xff] %v439
        %568 = vst [vmem:[%s135 + $0x170] sm:$0xff] %v440
        %569 = vst [vmem:[%s135 + $0x178] sm:$0xff] %v441
        %570 = vst [vmem:[%s135 + $0x180] sm:$0xff] %v442
        %571 = vst [vmem:[%s135 + $0x188] sm:$0xff] %v443
        %572 = vst [vmem:[%s135 + $0x190] sm:$0xff] %v444
        %573 = vst [vmem:[%s135 + $0x198] sm:$0xff] %v445
        %574 = vst [vmem:[%s135 + $0x1a0] sm:$0xff] %v446
        %575 = vst [vmem:[%s135 + $0x1a8] sm:$0xff] %v447
        %576 = vst [vmem:[%s135 + $0x1b0] sm:$0xff] %v448
        %577 = vst [vmem:[%s135 + $0x1b8] sm:$0xff] %v449
        %578 = vst [vmem:[%s135 + $0x1c0] sm:$0xff] %v450
        %579 = vst [vmem:[%s135 + $0x1c8] sm:$0xff] %v451
        %580 = vst [vmem:[%s135 + $0x1d0] sm:$0xff] %v452
        %581 = vst [vmem:[%s135 + $0x1d8] sm:$0xff] %v453
        %582 = vst [vmem:[%s135 + $0x1e0] sm:$0xff] %v454
        %583 = vst [vmem:[%s135 + $0x1e8] sm:$0xff] %v455
        %584 = vst [vmem:[%s135 + $0x1f0] sm:$0xff] %v456
        %585 = vst [vmem:[%s135 + $0x1f8] sm:$0xff] %v457
        %586 = vst [vmem:[%s135 + $0x200] sm:$0xff] %v458
        %587 = vst [vmem:[%s135 + $0x208] sm:$0xff] %v459
        %588 = vst [vmem:[%s135 + $0x210] sm:$0xff] %v460
        %589 = vst [vmem:[%s135 + $0x218] sm:$0xff] %v461
        %590 = vst [vmem:[%s135 + $0x220] sm:$0xff] %v462
        %591 = vst [vmem:[%s135 + $0x228] sm:$0xff] %v463
        %592 = vst [vmem:[%s135 + $0x230] sm:$0xff] %v464
        %593 = vst [vmem:[%s135 + $0x238] sm:$0xff] %v465
        %594 = vst [vmem:[%s135 + $0x240] sm:$0xff] %v466
        %595 = vst [vmem:[%s135 + $0x248] sm:$0xff] %v467
        %596 = vst [vmem:[%s135 + $0x250] sm:$0xff] %v468
        %597 = vst [vmem:[%s135 + $0x258] sm:$0xff] %v469
        %598 = vst [vmem:[%s135 + $0x260] sm:$0xff] %v470
        %599 = vst [vmem:[%s135 + $0x268] sm:$0xff] %v471
        %600 = vst [vmem:[%s135 + $0x270] sm:$0xff] %v472
        %601 = vst [vmem:[%s135 + $0x278] sm:$0xff] %v473
        %602 = vst [vmem:[%s135 + $0x280] sm:$0xff] %v474
        %603 = vst [vmem:[%s135 + $0x288] sm:$0xff] %v475
        %604 = vst [vmem:[%s135 + $0x290] sm:$0xff] %v476
        %605 = vst [vmem:[%s135 + $0x298] sm:$0xff] %v477
        %606 = vst [vmem:[%s135 + $0x2a0] sm:$0xff] %v478
        %607 = vst [vmem:[%s135 + $0x2a8] sm:$0xff] %v479
        %608 = vst [vmem:[%s135 + $0x2b0] sm:$0xff] %v480
        %609 = vst [vmem:[%s135 + $0x2b8] sm:$0xff] %v481
        %610 = vst [vmem:[%s135 + $0x2c0] sm:$0xff] %v482
        %611 = vst [vmem:[%s135 + $0x2c8] sm:$0xff] %v483
        %612 = vst [vmem:[%s135 + $0x2d0] sm:$0xff] %v484
        %613 = vst [vmem:[%s135 + $0x2d8] sm:$0xff] %v485
        %614 = vst [vmem:[%s135 + $0x2e0] sm:$0xff] %v486
        %615 = vst [vmem:[%s135 + $0x2e8] sm:$0xff] %v487
        %616 = vst [vmem:[%s135 + $0x2f0] sm:$0xff] %v488
        %617 = vst [vmem:[%s135 + $0x2f8] sm:$0xff] %v489
        %618 = vst [vmem:[%s135 + $0x300] sm:$0xff] %v490
        %619 = vst [vmem:[%s135 + $0x308] sm:$0xff] %v491
        %620 = vst [vmem:[%s135 + $0x310] sm:$0xff] %v492
        %621 = vst [vmem:[%s135 + $0x318] sm:$0xff] %v493
        %622 = vst [vmem:[%s135 + $0x320] sm:$0xff] %v494
        %623 = vst [vmem:[%s135 + $0x328] sm:$0xff] %v495
        %624 = vst [vmem:[%s135 + $0x330] sm:$0xff] %v496
        %625 = vst [vmem:[%s135 + $0x338] sm:$0xff] %v497
        %626 = vst [vmem:[%s135 + $0x340] sm:$0xff] %v498
        %627 = vst [vmem:[%s135 + $0x348] sm:$0xff] %v499
        %628 = vst [vmem:[%s135 + $0x350] sm:$0xff] %v500
        %629 = vst [vmem:[%s135 + $0x358] sm:$0xff] %v501
        %630 = vst [vmem:[%s135 + $0x360] sm:$0xff] %v502
        %631 = vst [vmem:[%s135 + $0x368] sm:$0xff] %v503
        %632 = vst [vmem:[%s135 + $0x370] sm:$0xff] %v504
        %633 = vst [vmem:[%s135 + $0x378] sm:$0xff] %v505
        %634 = vst [vmem:[%s135 + $0x380] sm:$0xff] %v506
        %635 = vst [vmem:[%s135 + $0x388] sm:$0xff] %v507
        %636 = vst [vmem:[%s135 + $0x390] sm:$0xff] %v508
        %637 = vst [vmem:[%s135 + $0x398] sm:$0xff] %v509
        %638 = vst [vmem:[%s135 + $0x3a0] sm:$0xff] %v510
        %639 = vst [vmem:[%s135 + $0x3a8] sm:$0xff] %v511
        %640 = vst [vmem:[%s135 + $0x3b0] sm:$0xff] %v512
        %641 = vst [vmem:[%s135 + $0x3b8] sm:$0xff] %v513
        %642 = vst [vmem:[%s135 + $0x3c0] sm:$0xff] %v514
        %643 = vst [vmem:[%s135 + $0x3c8] sm:$0xff] %v515
        %644 = vst [vmem:[%s135 + $0x3d0] sm:$0xff] %v516
        %645 = vst [vmem:[%s135 + $0x3d8] sm:$0xff] %v517
        %646 = vst [vmem:[%s135 + $0x3e0] sm:$0xff] %v518
        %647 = vst [vmem:[%s135 + $0x3e8] sm:$0xff] %v519
        %648 = vst [vmem:[%s135 + $0x3f0] sm:$0xff] %v520
        %649 = vst [vmem:[%s135 + $0x3f8] sm:$0xff] %v521
        %s650 = sand.u32 %s52, 1
        %s651 = scalar_lea.sflag [#allocation4], %s650
        %s652 = sand.u32 %s52, 1
        %s653 = smul.addr %s652, 1024
        %s654 = scalar_lea.vmem [#allocation5], %s653
        // Predicated region
        $region29: #{tpu_custom_call.1} parent=23 // pred_check
          %p655 = pneg %p62
        $region30: #{tpu_custom_call.1} parent=23 // pred_check_branch
          %657 = sbr.rel (%p655) target = $region32
        $region31: #{tpu_custom_call.1} parent=23 // pred_region
          %s658 = smul.u32 16, %s18
          %s660 = ssub.s32 16384, 16384
          %661 = vsyncadd %s651, %s660
          %s662 = smul.addr %s658, 8
          %s663 = smul.addr %s662, 128
          %s664 = scalar_lea.hbm %s1, %s663
          %s665 = sshll.u32 %s654, 4
          %s666 = int_to_ptr.vmem [resolvable:$true] %s665
          %671 = dma.vmem_to_hbm [thread:$0]  %s666, 16384, %s664, %s651, 1024, 1024, 64
        $region32: #{tpu_custom_call.1} parent=23 // pred_fallthru
          _
      $region24: #{tpu_custom_call.1} parent=5 // pred_fallthru
        _
      %p672 = scmp.le.s32.totalorder 2, %s13
      // Predicated region
      $region33: #{tpu_custom_call.1} parent=5 // pred_check
        %p673 = pneg %p672
      $region34: #{tpu_custom_call.1} parent=5 // pred_check_branch
        %675 = sbr.rel (%p673) target = $region36
      $region35: #{tpu_custom_call.1} parent=5 // pred_region
        %s676 = ssub.s32 %s13, 2
        // Predicated region
        $region37: #{tpu_custom_call.1} parent=35 // pred_check
          %p677 = pneg %p68
        $region38: #{tpu_custom_call.1} parent=35 // pred_check_branch
          %679 = sbr.rel (%p677) target = $region40
        $region39: #{tpu_custom_call.1} parent=35 // pred_region
          %s680 = sand.u32 %s53, 1
          %s681 = scalar_lea.sflag [#allocation4], %s680
          %s682 = sand.u32 %s53, 1
          %s683 = smul.addr %s682, 1024
          %s684 = scalar_lea.vmem [#allocation5], %s683
          %685 = dma.done %s681, 16384
        $region40: #{tpu_custom_call.1} parent=35 // pred_fallthru
          _
      $region36: #{tpu_custom_call.1} parent=5 // pred_fallthru
        _
    $region6: #{tpu_custom_call.1} parent=1 // loop_footer
      %s17 = sadd.s32 1, %s13
    $region7: #{tpu_custom_call.1} parent=1 // loop_footer_branch
      %12 = sbr.rel target = $region3
    $region8: #{tpu_custom_call.1} parent=1 // loop_exit
      _
    %686 = vsyncpa [#allocation3], 1
    %s687 = scalar_lea.sflag [#allocation3], 1
    %688 = vsyncpa %s687, 1
    %689 = vsyncpa [#allocation4], 1
    %s690 = scalar_lea.sflag [#allocation4], 1
    %691 = vsyncpa %s690, 1

</llo_original>
